<compile_context>
chip_gen: v7x
topology: tpu7x:2x2x1
jax: 0.10.0
libtpu: 0.0.40
codegen_flags: <defaults>
</compile_context>

<pallas_src>
import math

import jax
import jax.numpy as jnp
from jax.experimental import pallas as pl
from jax.experimental.pallas import tpu as pltpu


def _assemble_kernel(ytab_ref, xtab_ref, o_ref):
    # ytab_ref: (1, F, TH, 1)  sin/cos of the y embedding (row-only)
    # xtab_ref: (1, F, 1,  W)  sin/cos of the x embedding (col-only)
    # o_ref   : (1, 2F, TH, W) one batch's NCHW output tile
    _, F, TH, _ = ytab_ref.shape
    W = xtab_ref.shape[3]
    # Channels [0, F): y embedding -> lane-broadcast the row table across W.
    o_ref[:, :F] = jnp.broadcast_to(ytab_ref[...], (1, F, TH, W))
    # Channels [F, 2F): x embedding -> sublane-broadcast the col table across TH.
    o_ref[:, F:] = jnp.broadcast_to(xtab_ref[...], (1, F, TH, W))


def position_embedding_sine(x, num_pos_feats=64, temperature=10000,
                            normalize=False, scale=None):
    """x: (B, C, H, W), any dtype. Returns (B, 2*num_pos_feats, H, W) float32."""
    if scale is not None and normalize is False:
        raise ValueError('normalize should be True if scale is passed')
    if scale is None:
        scale = 2 * math.pi
    if num_pos_feats % 2 != 0:
        # The PyTorch stack/flatten interleave implicitly requires this too.
        raise ValueError('num_pos_feats must be even')

    B, _, H, W = x.shape
    F = num_pos_feats
    eps = 1e-6

    # dim_t = temperature ** (2 * (i // 2) / F); even channel -> sin, odd -> cos,
    # expressed as sin(p + pi/2) so a single table covers both.
    i = jnp.arange(F, dtype=jnp.float32)
    inv_dim_t = jnp.float32(temperature) ** (-2.0 * jnp.floor(i / 2.0) / F)   # (F,)
    phase = (jnp.arange(F, dtype=jnp.int32) % 2).astype(jnp.float32) * (math.pi / 2.0)
    y_scale = (float(scale) / (float(H) + eps)) if normalize else 1.0
    x_scale = (float(scale) / (float(W) + eps)) if normalize else 1.0

    # Tiny sine tables: (H + W) * F transcendentals in total (vs H*W*2F before).
    # not_mask is all-True, so the cumsums are simply (index + 1).
    hv = jnp.arange(1, H + 1, dtype=jnp.float32)
    wv = jnp.arange(1, W + 1, dtype=jnp.float32)
    ytab = jnp.sin(hv[None, :, None] * (inv_dim_t * y_scale)[:, None, None]
                   + phase[:, None, None])[None]            # (1, F, H, 1)
    xtab = jnp.sin(wv[None, None, :] * (inv_dim_t * x_scale)[:, None, None]
                   + phase[:, None, None])[None]            # (1, F, 1, W)

    # H tiling: one full-H block per batch for typical small maps; otherwise tile
    # H in multiples of 8 so the output block stays around <= 2 MiB (VMEM-safe on
    # v5e/v6e/v7x with the default scoped limit).
    w_pad = ((W + 127) // 128) * 128
    th_cap = max(8, (2 * 1024 * 1024 // (2 * F * w_pad * 4)) // 8 * 8)
    TH = H if H <= th_cap else th_cap
    nh = pl.cdiv(H, TH)

    return pl.pallas_call(
        _assemble_kernel,
        out_shape=jax.ShapeDtypeStruct((B, 2 * F, H, W), jnp.float32),
        grid=(B, nh),
        in_specs=[
            pl.BlockSpec((1, F, TH, 1), lambda b, h: (0, 0, h, 0)),
            pl.BlockSpec((1, F, 1, W), lambda b, h: (0, 0, 0, 0)),
        ],
        out_specs=pl.BlockSpec((1, 2 * F, TH, W), lambda b, h: (b, 0, h, 0)),
        compiler_params=pltpu.CompilerParams(
            dimension_semantics=("parallel", "parallel")),
    )(ytab, xtab)


def _reference(x, num_pos_feats, temperature, normalize, scale):
    """Pure-JAX mirror of the PyTorch forward (for correctness checking)."""
    B, _, H, W = x.shape
    not_mask = jnp.ones((B, H, W), jnp.float32)
    y_embed = jnp.cumsum(not_mask, axis=1)
    x_embed = jnp.cumsum(not_mask, axis=2)
    if normalize:
        eps = 1e-6
        y_embed = y_embed / (y_embed[:, -1:, :] + eps) * scale
        x_embed = x_embed / (x_embed[:, :, -1:] + eps) * scale
    i = jnp.arange(num_pos_feats, dtype=jnp.float32)
    dim_t = temperature ** (2.0 * jnp.floor(i / 2.0) / num_pos_feats)
    pos_x = x_embed[..., None] / dim_t
    pos_y = y_embed[..., None] / dim_t
    pos_x = jnp.stack([jnp.sin(pos_x[..., 0::2]), jnp.cos(pos_x[..., 1::2])],
                      axis=4).reshape(B, H, W, -1)
    pos_y = jnp.stack([jnp.sin(pos_y[..., 0::2]), jnp.cos(pos_y[..., 1::2])],
                      axis=4).reshape(B, H, W, -1)
    return jnp.concatenate([pos_y, pos_x], axis=3).transpose(0, 3, 1, 2)


if __name__ == "__main__":
    key = jax.random.PRNGKey(0)

    # Case 1: small, like the original harness (B=2, C=4, 16x16, F=32 -> 64 ch)
    B, C, H, W = 2, 4, 16, 16
    num_pos_feats = 32
    x = jax.random.normal(key, (B, C, H, W), dtype=jnp.float32)

    pos = position_embedding_sine(x, num_pos_feats=num_pos_feats)
    pos = jax.block_until_ready(pos)
    assert pos.shape == (B, 2 * num_pos_feats, H, W), pos.shape
    assert pos.dtype == jnp.float32
    ref = _reference(x, num_pos_feats, 10000, False, 2 * math.pi)
    assert jnp.allclose(pos, ref, atol=1e-4, rtol=1e-4), \
        float(jnp.max(jnp.abs(pos - ref)))

    # Case 2: odd spatial (7x7, typical TReS backbone output), F=64, normalize=True
    B2, C2, H2, W2 = 2, 4, 7, 7
    x2 = jax.random.normal(key, (B2, C2, H2, W2), dtype=jnp.float32)
    pos2 = position_embedding_sine(x2, num_pos_feats=64, normalize=True)
    pos2 = jax.block_until_ready(pos2)
    assert pos2.shape == (B2, 128, H2, W2), pos2.shape
    ref2 = _reference(x2, 64, 10000, True, 2 * math.pi)
    assert jnp.allclose(pos2, ref2, atol=1e-4, rtol=1e-4), \
        float(jnp.max(jnp.abs(pos2 - ref2)))

    print("KERNEL_OK")
</pallas_src>

<mosaic_0001>
module attributes {stable_mosaic.version = 11 : i64} {
  func.func @_assemble_kernel(%arg0: i32, %arg1: i32, %arg2: memref<1x32x16x1xf32, #tpu.memory_space<vmem>>, %arg3: memref<1x32x1x16xf32, #tpu.memory_space<vmem>>, %arg4: memref<1x64x16x16xf32, #tpu.memory_space<vmem>>) attributes {dimension_semantics = [#tpu.dimension_semantics<parallel>, #tpu.dimension_semantics<parallel>], iteration_bounds = array<i64: 2, 1>, scalar_prefetch = 0 : i64, scratch_operands = 0 : i64, tpu.core_type = #tpu.core_type<tc>, window_params = [{transform_indices = @transform_0, window_bounds = array<i64: 1, 32, 16, 1>}, {pipeline_mode = #tpu.pipeline_mode<synchronous>, transform_indices = @transform_1, window_bounds = array<i64: 1, 32, 1, 16>}, {transform_indices = @transform_2, window_bounds = array<i64: 1, 64, 16, 16>}]} {
    %c0 = arith.constant 0 : index
    %c0_0 = arith.constant 0 : index
    %c0_1 = arith.constant 0 : index
    %c0_2 = arith.constant 0 : index
    %0 = vector.load %arg2[%c0, %c0_0, %c0_1, %c0_2] : memref<1x32x16x1xf32, #tpu.memory_space<vmem>>, vector<1x32x16x1xf32>
    %1 = vector.shape_cast %0 : vector<1x32x16x1xf32> to vector<1x32x16x1xf32>
    %2 = vector.broadcast %1 : vector<1x32x16x1xf32> to vector<1x32x16x16xf32>
    %c0_3 = arith.constant 0 : index
    %c0_4 = arith.constant 0 : index
    %c0_5 = arith.constant 0 : index
    %c0_6 = arith.constant 0 : index
    %3 = vector.load %arg4[%c0_3, %c0_4, %c0_5, %c0_6] : memref<1x64x16x16xf32, #tpu.memory_space<vmem>>, vector<1x32x16x16xf32>
    tpu.vector_store %arg4[%c0_3, %c0_4, %c0_5, %c0_6], %2 {strides = array<i32>} : memref<1x64x16x16xf32, #tpu.memory_space<vmem>>, vector<1x32x16x16xf32>,
    %c0_7 = arith.constant 0 : index
    %c0_8 = arith.constant 0 : index
    %c0_9 = arith.constant 0 : index
    %c0_10 = arith.constant 0 : index
    %4 = vector.load %arg3[%c0_7, %c0_8, %c0_9, %c0_10] : memref<1x32x1x16xf32, #tpu.memory_space<vmem>>, vector<1x32x1x16xf32>
    %5 = vector.shape_cast %4 : vector<1x32x1x16xf32> to vector<1x32x1x16xf32>
    %6 = vector.broadcast %5 : vector<1x32x1x16xf32> to vector<1x32x16x16xf32>
    %c0_11 = arith.constant 0 : index
    %c32 = arith.constant 32 : index
    %c0_12 = arith.constant 0 : index
    %c0_13 = arith.constant 0 : index
    %7 = vector.load %arg4[%c0_11, %c32, %c0_12, %c0_13] : memref<1x64x16x16xf32, #tpu.memory_space<vmem>>, vector<1x32x16x16xf32>
    tpu.vector_store %arg4[%c0_11, %c32, %c0_12, %c0_13], %6 {strides = array<i32>} : memref<1x64x16x16xf32, #tpu.memory_space<vmem>>, vector<1x32x16x16xf32>,
    return
  }
  func.func @transform_0(%arg0: i32, %arg1: i32) -> (i32, i32, i32, i32) {
    %c0_i32 = arith.constant 0 : i32
    %c0_i32_0 = arith.constant 0 : i32
    %c0_i32_1 = arith.constant 0 : i32
    %c0_i32_2 = arith.constant 0 : i32
    return %c0_i32, %c0_i32_0, %arg1, %c0_i32_1 : i32, i32, i32, i32
  }
  func.func @transform_1(%arg0: i32, %arg1: i32) -> (i32, i32, i32, i32) {
    %c0_i32 = arith.constant 0 : i32
    %c0_i32_0 = arith.constant 0 : i32
    %c0_i32_1 = arith.constant 0 : i32
    %c0_i32_2 = arith.constant 0 : i32
    %c0_i32_3 = arith.constant 0 : i32
    return %c0_i32, %c0_i32_0, %c0_i32_1, %c0_i32_2 : i32, i32, i32, i32
  }
  func.func @transform_2(%arg0: i32, %arg1: i32) -> (i32, i32, i32, i32) {
    %c0_i32 = arith.constant 0 : i32
    %c0_i32_0 = arith.constant 0 : i32
    %c0_i32_1 = arith.constant 0 : i32
    return %arg0, %c0_i32, %arg1, %c0_i32_0 : i32, i32, i32, i32
  }
}

</mosaic_0001>

<llo_original>
// kernel: tpu_custom_call.1
$region0: #{tpu_custom_call.1}
  #allocation0 [shape = 'u32[]', space=smem, size = 0x4, offset = 0x4, fixed_abs, tag = 'smem constant byte address 0x4 - core index']
  #allocation1 [shape = 'u32[144,128]{1,0:T(1,128)}', space=vmem, size = 0x12000, scoped, tag = 'internal scratch']
  %s0 = inlined_call_operand.vmem [shape: f32[1,32,16,1], index: 0, kind: input, shape index: {}]
  %s1 = inlined_call_operand.vmem [shape: f32[1,32,1,16], index: 1, kind: input, shape index: {}]
  %s2 = inlined_call_operand.vmem [shape: f32[2,64,16,16], index: 2, kind: output, shape index: {}]
  %s3 = sld [smem:[#allocation0]]
  $region41: #{tpu_custom_call.1} parent=0
    _
  %s5 = ssub.s32 1, %s3
  %s6 = scalar_select 0, %s5, %s3
  loop: start=0, step=1, limit=4
  $region2: #{tpu_custom_call.1} parent=0 // loop_pre_header
    _
  $region3: #{tpu_custom_call.1} parent=0 // loop_header
    %s8 = sphi 0, %s12
    %p9 = scmp.ge.s32.totalorder %s8, 4
    %s15 = sphi 0, %s27
    %s16 = sphi 0, %s23
    %s17 = sphi 0, %s15
    %s18 = sphi 0, %s16
    %s19 = sphi 0, %s17
    %s20 = sphi 0, %s18
    %s30 = sphi 0, %s32
    %s33 = sphi 0, %s30
    %s34 = sphi 0, %s33
    %s50 = sphi 0, %s34
    %s54 = sphi 0, %s54
    %s56 = sphi 0, %s54
    %s57 = sphi 0, %s56
    %s71 = sphi 0, %s57
    %s79 = sphi 0, %s81
    %s82 = sphi 0, %s79
    %s83 = sphi 0, %s82
    %s99 = sphi 0, %s83
  $region4: #{tpu_custom_call.1} parent=0 // loop_header_branch
    %11 = sbr.rel (%p9) target = $region8
  $region5: #{tpu_custom_call.1} parent=0 // loop_body
    %s13 = ssub.s32 %s8, 1
    %s14 = ssub.s32 %s8, 2
    %s21 = sadd.s32 1, %s16
    %p22 = scmp.ge.s32.totalorder %s21, 1
    %s23 = scalar_select %p22, 0, %s21
    %s24 = sadd.s32 1, %s15
    %s25 = scalar_select %p22, %s24, %s15
    %p26 = scmp.ge.s32.totalorder %s25, 2
    %s27 = scalar_select %p26, 0, %s25
    %s28 = ssub.s32 %s16, %s23
    %p29 = scmp.eq.s32.totalorder %s28, 0
    %s31 = sadd.s32 %s30, 1
    %s32 = scalar_select %p29, %s30, %s31
    %p35 = pneg %p29
    %p36 = scmp.eq.s32.totalorder %s8, 1
    %p37 = por %p35, %p36
    %p38 = scmp.ne.s32.totalorder %s30, %s33
    %p39 = scmp.eq.s32.totalorder %s8, 0
    %p40 = por %p38, %p39
    %p41 = scmp.ne.s32.totalorder %s30, %s33
    %p42 = scmp.eq.s32.totalorder %s13, 1
    %p43 = por %p41, %p42
    %p44 = scmp.ne.s32.totalorder %s33, %s34
    %p45 = scmp.eq.s32.totalorder %s13, 0
    %p46 = por %p44, %p45
    %p47 = scmp.ne.s32.totalorder %s33, %s34
    %p48 = scmp.eq.s32.totalorder %s14, 1
    %p49 = por %p47, %p48
    %p51 = scmp.ne.s32.totalorder %s34, %s50
    %p52 = scmp.eq.s32.totalorder %s14, 0
    %p53 = por %p51, %p52
    %s55 = sadd.s32 %s54, 1
    %p58 = scmp.eq.s32.totalorder %s8, 1
    %p59 = scmp.ne.s32.totalorder %s54, %s56
    %p60 = scmp.eq.s32.totalorder %s8, 0
    %p61 = por %p59, %p60
    %p62 = scmp.ne.s32.totalorder %s54, %s56
    %p63 = scmp.eq.s32.totalorder %s13, 1
    %p64 = por %p62, %p63
    %p65 = scmp.ne.s32.totalorder %s56, %s57
    %p66 = scmp.eq.s32.totalorder %s13, 0
    %p67 = por %p65, %p66
    %p68 = scmp.ne.s32.totalorder %s56, %s57
    %p69 = scmp.eq.s32.totalorder %s14, 1
    %p70 = por %p68, %p69
    %p72 = scmp.ne.s32.totalorder %s57, %s71
    %p73 = scmp.eq.s32.totalorder %s14, 0
    %p74 = por %p72, %p73
    %s75 = ssub.s32 %s15, %s27
    %s76 = ssub.s32 %s16, %s23
    %s77 = sor.u32 %s75, %s76
    %p78 = scmp.eq.s32.totalorder %s77, 0
    %s80 = sadd.s32 %s79, 1
    %s81 = scalar_select %p78, %s79, %s80
    %p84 = pneg %p78
    %p85 = scmp.eq.s32.totalorder %s8, 1
    %p86 = por %p84, %p85
    %p87 = scmp.ne.s32.totalorder %s79, %s82
    %p88 = scmp.eq.s32.totalorder %s8, 0
    %p89 = por %p87, %p88
    %p90 = scmp.ne.s32.totalorder %s79, %s82
    %p91 = scmp.eq.s32.totalorder %s13, 1
    %p92 = por %p90, %p91
    %p93 = scmp.ne.s32.totalorder %s82, %s83
    %p94 = scmp.eq.s32.totalorder %s13, 0
    %p95 = por %p93, %p94
    %p96 = scmp.ne.s32.totalorder %s82, %s83
    %p97 = scmp.eq.s32.totalorder %s14, 1
    %p98 = por %p96, %p97
    %p100 = scmp.ne.s32.totalorder %s83, %s99
    %p101 = scmp.eq.s32.totalorder %s14, 0
    %p102 = por %p100, %p101
    %p103 = scmp.le.s32.totalorder 1, %s8
    %p104 = scmp.lt.s32.totalorder %s8, 3
    %p105 = pnand %p103, %p104
    %p106 = pneg %p105
    // Predicated region
    $region9: #{tpu_custom_call.1} parent=5 // pred_check
      _
    $region10: #{tpu_custom_call.1} parent=5 // pred_check_branch
      %108 = sbr.rel (%p105) target = $region12
    $region11: #{tpu_custom_call.1} parent=5 // pred_region
      %s109 = ssub.s32 %s8, 1
      // Predicated region
      $region13: #{tpu_custom_call.1} parent=11 // pred_check
        %p110 = pneg %p46
      $region14: #{tpu_custom_call.1} parent=11 // pred_check_branch
        %112 = sbr.rel (%p110) target = $region16
      $region15: #{tpu_custom_call.1} parent=11 // pred_region
        %s113 = smul.u32 2, %s18
        %p114 = scmp.lt.s32.totalorder %s113, 1
        %s115 = scalar_select %p114, %s113, 1
        %s116 = smul.addr %s115, 8
        %s117 = scalar_lea.vmem %s0, %s116
        %s118 = smul.u32 2, %s18
      $region16: #{tpu_custom_call.1} parent=11 // pred_fallthru
        _
      // Predicated region
      $region17: #{tpu_custom_call.1} parent=11 // pred_check
        %p119 = pneg %p67
      $region18: #{tpu_custom_call.1} parent=11 // pred_check_branch
        %121 = sbr.rel (%p119) target = $region20
      $region19: #{tpu_custom_call.1} parent=11 // pred_region
        _
      $region20: #{tpu_custom_call.1} parent=11 // pred_fallthru
        _
    $region12: #{tpu_custom_call.1} parent=5 // pred_fallthru
      _
    %p122 = scmp.lt.s32.totalorder %s8, 2
    // Predicated region
    $region21: #{tpu_custom_call.1} parent=5 // pred_check
      %p123 = pneg %p122
    $region22: #{tpu_custom_call.1} parent=5 // pred_check_branch
      %125 = sbr.rel (%p123) target = $region24
    $region23: #{tpu_custom_call.1} parent=5 // pred_region
      _
    $region24: #{tpu_custom_call.1} parent=5 // pred_fallthru
      _
    %p126 = scmp.le.s32.totalorder 1, %s8
    %p127 = scmp.lt.s32.totalorder %s8, 3
    %p128 = pnand %p126, %p127
    %p129 = pneg %p128
    // Predicated region
    $region25: #{tpu_custom_call.1} parent=5 // pred_check
      _
    $region26: #{tpu_custom_call.1} parent=5 // pred_check_branch
      %131 = sbr.rel (%p128) target = $region28
    $region27: #{tpu_custom_call.1} parent=5 // pred_region
      %s132 = ssub.s32 %s8, 1
      %s133 = smul.u32 2, %s18
      %p134 = scmp.lt.s32.totalorder %s133, 1
      %s135 = scalar_select %p134, %s133, 1
      %s136 = smul.addr %s135, 8
      %s137 = scalar_lea.vmem %s0, %s136
      %p138 = pneg %p46
      %p139 = pneg %p43
      %p140 = pneg %p67
      %p141 = pneg %p64
      %p142 = pneg %p95
      %p143 = pneg %p92
      %s144 = smul.u32 2, %s18
      %p145 = scmp.lt.s32.totalorder %s17, 1
      %s146 = scalar_select %p145, %s17, 1
      %p147 = scmp.lt.s32.totalorder %s144, 1
      %s148 = scalar_select %p147, %s144, 1
      %s149 = smul.addr %s146, 128
      %s150 = sadd.s32 %s148, %s149
      %s151 = smul.addr %s150, 8
      %s152 = scalar_lea.vmem %s2, %s151
      %s153 = smul.u32 2, %s18
      %p154 = scmp.lt.s32.totalorder %s153, 1
      %s155 = scalar_select %p154, %s153, 1
      %s156 = smul.addr %s155, 8
      %s157 = scalar_lea.vmem %s0, %s156
      %s158 = smul.u32 2, %s18
      %s159 = smul.u32 2, %s18
      %p160 = scmp.lt.s32.totalorder %s17, 1
      %s161 = scalar_select %p160, %s17, 1
      %p162 = scmp.lt.s32.totalorder %s159, 1
      %s163 = scalar_select %p162, %s159, 1
      %s164 = smul.addr %s161, 128
      %s165 = sadd.s32 %s163, %s164
      %s166 = smul.addr %s165, 8
      %s167 = scalar_lea.vmem %s2, %s166
      %s168 = smul.u32 2, %s18
      %v169 = vld [vmem:[%s157] sm:$0xff]
      %v170 = vld [vmem:[%s157 + $0x8] sm:$0xff]
      %v171 = vld [vmem:[%s157 + $0x10] sm:$0xff]
      %v172 = vld [vmem:[%s157 + $0x18] sm:$0xff]
      %v173 = vld [vmem:[%s157 + $0x20] sm:$0xff]
      %v174 = vld [vmem:[%s157 + $0x28] sm:$0xff]
      %v175 = vld [vmem:[%s157 + $0x30] sm:$0xff]
      %v176 = vld [vmem:[%s157 + $0x38] sm:$0xff]
      %v177 = vld [vmem:[%s157 + $0x40] sm:$0xff]
      %v178 = vld [vmem:[%s157 + $0x48] sm:$0xff]
      %v179 = vld [vmem:[%s157 + $0x50] sm:$0xff]
      %v180 = vld [vmem:[%s157 + $0x58] sm:$0xff]
      %v181 = vld [vmem:[%s157 + $0x60] sm:$0xff]
      %v182 = vld [vmem:[%s157 + $0x68] sm:$0xff]
      %v183 = vld [vmem:[%s157 + $0x70] sm:$0xff]
      %v184 = vld [vmem:[%s157 + $0x78] sm:$0xff]
      %v185 = vld [vmem:[%s157 + $0x80] sm:$0xff]
      %v186 = vld [vmem:[%s157 + $0x88] sm:$0xff]
      %v187 = vld [vmem:[%s157 + $0x90] sm:$0xff]
      %v188 = vld [vmem:[%s157 + $0x98] sm:$0xff]
      %v189 = vld [vmem:[%s157 + $0xa0] sm:$0xff]
      %v190 = vld [vmem:[%s157 + $0xa8] sm:$0xff]
      %v191 = vld [vmem:[%s157 + $0xb0] sm:$0xff]
      %v192 = vld [vmem:[%s157 + $0xb8] sm:$0xff]
      %v193 = vld [vmem:[%s157 + $0xc0] sm:$0xff]
      %v194 = vld [vmem:[%s157 + $0xc8] sm:$0xff]
      %v195 = vld [vmem:[%s157 + $0xd0] sm:$0xff]
      %v196 = vld [vmem:[%s157 + $0xd8] sm:$0xff]
      %v197 = vld [vmem:[%s157 + $0xe0] sm:$0xff]
      %v198 = vld [vmem:[%s157 + $0xe8] sm:$0xff]
      %v199 = vld [vmem:[%s157 + $0xf0] sm:$0xff]
      %v200 = vld [vmem:[%s157 + $0xf8] sm:$0xff]
      %v201 = vld [vmem:[%s157 + $0x100] sm:$0xff]
      %v202 = vld [vmem:[%s157 + $0x108] sm:$0xff]
      %v203 = vld [vmem:[%s157 + $0x110] sm:$0xff]
      %v204 = vld [vmem:[%s157 + $0x118] sm:$0xff]
      %v205 = vld [vmem:[%s157 + $0x120] sm:$0xff]
      %v206 = vld [vmem:[%s157 + $0x128] sm:$0xff]
      %v207 = vld [vmem:[%s157 + $0x130] sm:$0xff]
      %v208 = vld [vmem:[%s157 + $0x138] sm:$0xff]
      %v209 = vld [vmem:[%s157 + $0x140] sm:$0xff]
      %v210 = vld [vmem:[%s157 + $0x148] sm:$0xff]
      %v211 = vld [vmem:[%s157 + $0x150] sm:$0xff]
      %v212 = vld [vmem:[%s157 + $0x158] sm:$0xff]
      %v213 = vld [vmem:[%s157 + $0x160] sm:$0xff]
      %v214 = vld [vmem:[%s157 + $0x168] sm:$0xff]
      %v215 = vld [vmem:[%s157 + $0x170] sm:$0xff]
      %v216 = vld [vmem:[%s157 + $0x178] sm:$0xff]
      %v217 = vld [vmem:[%s157 + $0x180] sm:$0xff]
      %v218 = vld [vmem:[%s157 + $0x188] sm:$0xff]
      %v219 = vld [vmem:[%s157 + $0x190] sm:$0xff]
      %v220 = vld [vmem:[%s157 + $0x198] sm:$0xff]
      %v221 = vld [vmem:[%s157 + $0x1a0] sm:$0xff]
      %v222 = vld [vmem:[%s157 + $0x1a8] sm:$0xff]
      %v223 = vld [vmem:[%s157 + $0x1b0] sm:$0xff]
      %v224 = vld [vmem:[%s157 + $0x1b8] sm:$0xff]
      %v225 = vld [vmem:[%s157 + $0x1c0] sm:$0xff]
      %v226 = vld [vmem:[%s157 + $0x1c8] sm:$0xff]
      %v227 = vld [vmem:[%s157 + $0x1d0] sm:$0xff]
      %v228 = vld [vmem:[%s157 + $0x1d8] sm:$0xff]
      %v229 = vld [vmem:[%s157 + $0x1e0] sm:$0xff]
      %v230 = vld [vmem:[%s157 + $0x1e8] sm:$0xff]
      %v231 = vld [vmem:[%s157 + $0x1f0] sm:$0xff]
      %v232 = vld [vmem:[%s157 + $0x1f8] sm:$0xff]
      %234 = vset.pattern.permute.xlu0 0
      %235 = vperm.xlu0 %234, %v169
      %v236 = vpop.permute.xlu0 %235
      %239 = vset.pattern.permute.xlu0 0
      %240 = vperm.xlu0 %239, %v170
      %v241 = vpop.permute.xlu0 %240
      %244 = vset.pattern.permute.xlu0 0
      %245 = vperm.xlu0 %244, %v171
      %v246 = vpop.permute.xlu0 %245
      %249 = vset.pattern.permute.xlu0 0
      %250 = vperm.xlu0 %249, %v172
      %v251 = vpop.permute.xlu0 %250
      %254 = vset.pattern.permute.xlu0 0
      %255 = vperm.xlu0 %254, %v173
      %v256 = vpop.permute.xlu0 %255
      %259 = vset.pattern.permute.xlu0 0
      %260 = vperm.xlu0 %259, %v174
      %v261 = vpop.permute.xlu0 %260
      %264 = vset.pattern.permute.xlu0 0
      %265 = vperm.xlu0 %264, %v175
      %v266 = vpop.permute.xlu0 %265
      %269 = vset.pattern.permute.xlu0 0
      %270 = vperm.xlu0 %269, %v176
      %v271 = vpop.permute.xlu0 %270
      %274 = vset.pattern.permute.xlu0 0
      %275 = vperm.xlu0 %274, %v177
      %v276 = vpop.permute.xlu0 %275
      %279 = vset.pattern.permute.xlu0 0
      %280 = vperm.xlu0 %279, %v178
      %v281 = vpop.permute.xlu0 %280
      %284 = vset.pattern.permute.xlu0 0
      %285 = vperm.xlu0 %284, %v179
      %v286 = vpop.permute.xlu0 %285
      %289 = vset.pattern.permute.xlu0 0
      %290 = vperm.xlu0 %289, %v180
      %v291 = vpop.permute.xlu0 %290
      %294 = vset.pattern.permute.xlu0 0
      %295 = vperm.xlu0 %294, %v181
      %v296 = vpop.permute.xlu0 %295
      %299 = vset.pattern.permute.xlu0 0
      %300 = vperm.xlu0 %299, %v182
      %v301 = vpop.permute.xlu0 %300
      %304 = vset.pattern.permute.xlu0 0
      %305 = vperm.xlu0 %304, %v183
      %v306 = vpop.permute.xlu0 %305
      %309 = vset.pattern.permute.xlu0 0
      %310 = vperm.xlu0 %309, %v184
      %v311 = vpop.permute.xlu0 %310
      %314 = vset.pattern.permute.xlu0 0
      %315 = vperm.xlu0 %314, %v185
      %v316 = vpop.permute.xlu0 %315
      %319 = vset.pattern.permute.xlu0 0
      %320 = vperm.xlu0 %319, %v186
      %v321 = vpop.permute.xlu0 %320
      %324 = vset.pattern.permute.xlu0 0
      %325 = vperm.xlu0 %324, %v187
      %v326 = vpop.permute.xlu0 %325
      %329 = vset.pattern.permute.xlu0 0
      %330 = vperm.xlu0 %329, %v188
      %v331 = vpop.permute.xlu0 %330
      %334 = vset.pattern.permute.xlu0 0
      %335 = vperm.xlu0 %334, %v189
      %v336 = vpop.permute.xlu0 %335
      %339 = vset.pattern.permute.xlu0 0
      %340 = vperm.xlu0 %339, %v190
      %v341 = vpop.permute.xlu0 %340
      %344 = vset.pattern.permute.xlu0 0
      %345 = vperm.xlu0 %344, %v191
      %v346 = vpop.permute.xlu0 %345
      %349 = vset.pattern.permute.xlu0 0
      %350 = vperm.xlu0 %349, %v192
      %v351 = vpop.permute.xlu0 %350
      %354 = vset.pattern.permute.xlu0 0
      %355 = vperm.xlu0 %354, %v193
      %v356 = vpop.permute.xlu0 %355
      %359 = vset.pattern.permute.xlu0 0
      %360 = vperm.xlu0 %359, %v194
      %v361 = vpop.permute.xlu0 %360
      %364 = vset.pattern.permute.xlu0 0
      %365 = vperm.xlu0 %364, %v195
      %v366 = vpop.permute.xlu0 %365
      %369 = vset.pattern.permute.xlu0 0
      %370 = vperm.xlu0 %369, %v196
      %v371 = vpop.permute.xlu0 %370
      %374 = vset.pattern.permute.xlu0 0
      %375 = vperm.xlu0 %374, %v197
      %v376 = vpop.permute.xlu0 %375
      %379 = vset.pattern.permute.xlu0 0
      %380 = vperm.xlu0 %379, %v198
      %v381 = vpop.permute.xlu0 %380
      %384 = vset.pattern.permute.xlu0 0
      %385 = vperm.xlu0 %384, %v199
      %v386 = vpop.permute.xlu0 %385
      %389 = vset.pattern.permute.xlu0 0
      %390 = vperm.xlu0 %389, %v200
      %v391 = vpop.permute.xlu0 %390
      %394 = vset.pattern.permute.xlu0 0
      %395 = vperm.xlu0 %394, %v201
      %v396 = vpop.permute.xlu0 %395
      %399 = vset.pattern.permute.xlu0 0
      %400 = vperm.xlu0 %399, %v202
      %v401 = vpop.permute.xlu0 %400
      %404 = vset.pattern.permute.xlu0 0
      %405 = vperm.xlu0 %404, %v203
      %v406 = vpop.permute.xlu0 %405
      %409 = vset.pattern.permute.xlu0 0
      %410 = vperm.xlu0 %409, %v204
      %v411 = vpop.permute.xlu0 %410
      %414 = vset.pattern.permute.xlu0 0
      %415 = vperm.xlu0 %414, %v205
      %v416 = vpop.permute.xlu0 %415
      %419 = vset.pattern.permute.xlu0 0
      %420 = vperm.xlu0 %419, %v206
      %v421 = vpop.permute.xlu0 %420
      %424 = vset.pattern.permute.xlu0 0
      %425 = vperm.xlu0 %424, %v207
      %v426 = vpop.permute.xlu0 %425
      %429 = vset.pattern.permute.xlu0 0
      %430 = vperm.xlu0 %429, %v208
      %v431 = vpop.permute.xlu0 %430
      %434 = vset.pattern.permute.xlu0 0
      %435 = vperm.xlu0 %434, %v209
      %v436 = vpop.permute.xlu0 %435
      %439 = vset.pattern.permute.xlu0 0
      %440 = vperm.xlu0 %439, %v210
      %v441 = vpop.permute.xlu0 %440
      %444 = vset.pattern.permute.xlu0 0
      %445 = vperm.xlu0 %444, %v211
      %v446 = vpop.permute.xlu0 %445
      %449 = vset.pattern.permute.xlu0 0
      %450 = vperm.xlu0 %449, %v212
      %v451 = vpop.permute.xlu0 %450
      %454 = vset.pattern.permute.xlu0 0
      %455 = vperm.xlu0 %454, %v213
      %v456 = vpop.permute.xlu0 %455
      %459 = vset.pattern.permute.xlu0 0
      %460 = vperm.xlu0 %459, %v214
      %v461 = vpop.permute.xlu0 %460
      %464 = vset.pattern.permute.xlu0 0
      %465 = vperm.xlu0 %464, %v215
      %v466 = vpop.permute.xlu0 %465
      %469 = vset.pattern.permute.xlu0 0
      %470 = vperm.xlu0 %469, %v216
      %v471 = vpop.permute.xlu0 %470
      %474 = vset.pattern.permute.xlu0 0
      %475 = vperm.xlu0 %474, %v217
      %v476 = vpop.permute.xlu0 %475
      %479 = vset.pattern.permute.xlu0 0
      %480 = vperm.xlu0 %479, %v218
      %v481 = vpop.permute.xlu0 %480
      %484 = vset.pattern.permute.xlu0 0
      %485 = vperm.xlu0 %484, %v219
      %v486 = vpop.permute.xlu0 %485
      %489 = vset.pattern.permute.xlu0 0
      %490 = vperm.xlu0 %489, %v220
      %v491 = vpop.permute.xlu0 %490
      %494 = vset.pattern.permute.xlu0 0
      %495 = vperm.xlu0 %494, %v221
      %v496 = vpop.permute.xlu0 %495
      %499 = vset.pattern.permute.xlu0 0
      %500 = vperm.xlu0 %499, %v222
      %v501 = vpop.permute.xlu0 %500
      %504 = vset.pattern.permute.xlu0 0
      %505 = vperm.xlu0 %504, %v223
      %v506 = vpop.permute.xlu0 %505
      %509 = vset.pattern.permute.xlu0 0
      %510 = vperm.xlu0 %509, %v224
      %v511 = vpop.permute.xlu0 %510
      %514 = vset.pattern.permute.xlu0 0
      %515 = vperm.xlu0 %514, %v225
      %v516 = vpop.permute.xlu0 %515
      %519 = vset.pattern.permute.xlu0 0
      %520 = vperm.xlu0 %519, %v226
      %v521 = vpop.permute.xlu0 %520
      %524 = vset.pattern.permute.xlu0 0
      %525 = vperm.xlu0 %524, %v227
      %v526 = vpop.permute.xlu0 %525
      %529 = vset.pattern.permute.xlu0 0
      %530 = vperm.xlu0 %529, %v228
      %v531 = vpop.permute.xlu0 %530
      %534 = vset.pattern.permute.xlu0 0
      %535 = vperm.xlu0 %534, %v229
      %v536 = vpop.permute.xlu0 %535
      %539 = vset.pattern.permute.xlu0 0
      %540 = vperm.xlu0 %539, %v230
      %v541 = vpop.permute.xlu0 %540
      %544 = vset.pattern.permute.xlu0 0
      %545 = vperm.xlu0 %544, %v231
      %v546 = vpop.permute.xlu0 %545
      %549 = vset.pattern.permute.xlu0 0
      %550 = vperm.xlu0 %549, %v232
      %v551 = vpop.permute.xlu0 %550
      %vm553 = vcmask 130048
      %554 = vst.msk [vmem:[%s167] sm:$0xff] %vm553, %v236
      %555 = vst.msk [vmem:[%s167 + $0x8] sm:$0xff] %vm553, %v241
      %556 = vst.msk [vmem:[%s167 + $0x10] sm:$0xff] %vm553, %v246
      %557 = vst.msk [vmem:[%s167 + $0x18] sm:$0xff] %vm553, %v251
      %558 = vst.msk [vmem:[%s167 + $0x20] sm:$0xff] %vm553, %v256
      %559 = vst.msk [vmem:[%s167 + $0x28] sm:$0xff] %vm553, %v261
      %560 = vst.msk [vmem:[%s167 + $0x30] sm:$0xff] %vm553, %v266
      %561 = vst.msk [vmem:[%s167 + $0x38] sm:$0xff] %vm553, %v271
      %562 = vst.msk [vmem:[%s167 + $0x40] sm:$0xff] %vm553, %v276
      %563 = vst.msk [vmem:[%s167 + $0x48] sm:$0xff] %vm553, %v281
      %564 = vst.msk [vmem:[%s167 + $0x50] sm:$0xff] %vm553, %v286
      %565 = vst.msk [vmem:[%s167 + $0x58] sm:$0xff] %vm553, %v291
      %566 = vst.msk [vmem:[%s167 + $0x60] sm:$0xff] %vm553, %v296
      %567 = vst.msk [vmem:[%s167 + $0x68] sm:$0xff] %vm553, %v301
      %568 = vst.msk [vmem:[%s167 + $0x70] sm:$0xff] %vm553, %v306
      %569 = vst.msk [vmem:[%s167 + $0x78] sm:$0xff] %vm553, %v311
      %570 = vst.msk [vmem:[%s167 + $0x80] sm:$0xff] %vm553, %v316
      %571 = vst.msk [vmem:[%s167 + $0x88] sm:$0xff] %vm553, %v321
      %572 = vst.msk [vmem:[%s167 + $0x90] sm:$0xff] %vm553, %v326
      %573 = vst.msk [vmem:[%s167 + $0x98] sm:$0xff] %vm553, %v331
      %574 = vst.msk [vmem:[%s167 + $0xa0] sm:$0xff] %vm553, %v336
      %575 = vst.msk [vmem:[%s167 + $0xa8] sm:$0xff] %vm553, %v341
      %576 = vst.msk [vmem:[%s167 + $0xb0] sm:$0xff] %vm553, %v346
      %577 = vst.msk [vmem:[%s167 + $0xb8] sm:$0xff] %vm553, %v351
      %578 = vst.msk [vmem:[%s167 + $0xc0] sm:$0xff] %vm553, %v356
      %579 = vst.msk [vmem:[%s167 + $0xc8] sm:$0xff] %vm553, %v361
      %580 = vst.msk [vmem:[%s167 + $0xd0] sm:$0xff] %vm553, %v366
      %581 = vst.msk [vmem:[%s167 + $0xd8] sm:$0xff] %vm553, %v371
      %582 = vst.msk [vmem:[%s167 + $0xe0] sm:$0xff] %vm553, %v376
      %583 = vst.msk [vmem:[%s167 + $0xe8] sm:$0xff] %vm553, %v381
      %584 = vst.msk [vmem:[%s167 + $0xf0] sm:$0xff] %vm553, %v386
      %585 = vst.msk [vmem:[%s167 + $0xf8] sm:$0xff] %vm553, %v391
      %586 = vst.msk [vmem:[%s167 + $0x100] sm:$0xff] %vm553, %v396
      %587 = vst.msk [vmem:[%s167 + $0x108] sm:$0xff] %vm553, %v401
      %588 = vst.msk [vmem:[%s167 + $0x110] sm:$0xff] %vm553, %v406
      %589 = vst.msk [vmem:[%s167 + $0x118] sm:$0xff] %vm553, %v411
      %590 = vst.msk [vmem:[%s167 + $0x120] sm:$0xff] %vm553, %v416
      %591 = vst.msk [vmem:[%s167 + $0x128] sm:$0xff] %vm553, %v421
      %592 = vst.msk [vmem:[%s167 + $0x130] sm:$0xff] %vm553, %v426
      %593 = vst.msk [vmem:[%s167 + $0x138] sm:$0xff] %vm553, %v431
      %594 = vst.msk [vmem:[%s167 + $0x140] sm:$0xff] %vm553, %v436
      %595 = vst.msk [vmem:[%s167 + $0x148] sm:$0xff] %vm553, %v441
      %596 = vst.msk [vmem:[%s167 + $0x150] sm:$0xff] %vm553, %v446
      %597 = vst.msk [vmem:[%s167 + $0x158] sm:$0xff] %vm553, %v451
      %598 = vst.msk [vmem:[%s167 + $0x160] sm:$0xff] %vm553, %v456
      %599 = vst.msk [vmem:[%s167 + $0x168] sm:$0xff] %vm553, %v461
      %600 = vst.msk [vmem:[%s167 + $0x170] sm:$0xff] %vm553, %v466
      %601 = vst.msk [vmem:[%s167 + $0x178] sm:$0xff] %vm553, %v471
      %602 = vst.msk [vmem:[%s167 + $0x180] sm:$0xff] %vm553, %v476
      %603 = vst.msk [vmem:[%s167 + $0x188] sm:$0xff] %vm553, %v481
      %604 = vst.msk [vmem:[%s167 + $0x190] sm:$0xff] %vm553, %v486
      %605 = vst.msk [vmem:[%s167 + $0x198] sm:$0xff] %vm553, %v491
      %606 = vst.msk [vmem:[%s167 + $0x1a0] sm:$0xff] %vm553, %v496
      %607 = vst.msk [vmem:[%s167 + $0x1a8] sm:$0xff] %vm553, %v501
      %608 = vst.msk [vmem:[%s167 + $0x1b0] sm:$0xff] %vm553, %v506
      %609 = vst.msk [vmem:[%s167 + $0x1b8] sm:$0xff] %vm553, %v511
      %610 = vst.msk [vmem:[%s167 + $0x1c0] sm:$0xff] %vm553, %v516
      %611 = vst.msk [vmem:[%s167 + $0x1c8] sm:$0xff] %vm553, %v521
      %612 = vst.msk [vmem:[%s167 + $0x1d0] sm:$0xff] %vm553, %v526
      %613 = vst.msk [vmem:[%s167 + $0x1d8] sm:$0xff] %vm553, %v531
      %614 = vst.msk [vmem:[%s167 + $0x1e0] sm:$0xff] %vm553, %v536
      %615 = vst.msk [vmem:[%s167 + $0x1e8] sm:$0xff] %vm553, %v541
      %616 = vst.msk [vmem:[%s167 + $0x1f0] sm:$0xff] %vm553, %v546
      %617 = vst.msk [vmem:[%s167 + $0x1f8] sm:$0xff] %vm553, %v551
      %v618 = vld [vmem:[%s1] sm:$0x1]
      %v619 = vld [vmem:[%s1 + $0x1] sm:$0x1]
      %v620 = vld [vmem:[%s1 + $0x2] sm:$0x1]
      %v621 = vld [vmem:[%s1 + $0x3] sm:$0x1]
      %v622 = vld [vmem:[%s1 + $0x4] sm:$0x1]
      %v623 = vld [vmem:[%s1 + $0x5] sm:$0x1]
      %v624 = vld [vmem:[%s1 + $0x6] sm:$0x1]
      %v625 = vld [vmem:[%s1 + $0x7] sm:$0x1]
      %v626 = vld [vmem:[%s1 + $0x8] sm:$0x1]
      %v627 = vld [vmem:[%s1 + $0x9] sm:$0x1]
      %v628 = vld [vmem:[%s1 + $0xa] sm:$0x1]
      %v629 = vld [vmem:[%s1 + $0xb] sm:$0x1]
      %v630 = vld [vmem:[%s1 + $0xc] sm:$0x1]
      %v631 = vld [vmem:[%s1 + $0xd] sm:$0x1]
      %v632 = vld [vmem:[%s1 + $0xe] sm:$0x1]
      %v633 = vld [vmem:[%s1 + $0xf] sm:$0x1]
      %v634 = vld [vmem:[%s1 + $0x10] sm:$0x1]
      %v635 = vld [vmem:[%s1 + $0x11] sm:$0x1]
      %v636 = vld [vmem:[%s1 + $0x12] sm:$0x1]
      %v637 = vld [vmem:[%s1 + $0x13] sm:$0x1]
      %v638 = vld [vmem:[%s1 + $0x14] sm:$0x1]
      %v639 = vld [vmem:[%s1 + $0x15] sm:$0x1]
      %v640 = vld [vmem:[%s1 + $0x16] sm:$0x1]
      %v641 = vld [vmem:[%s1 + $0x17] sm:$0x1]
      %v642 = vld [vmem:[%s1 + $0x18] sm:$0x1]
      %v643 = vld [vmem:[%s1 + $0x19] sm:$0x1]
      %v644 = vld [vmem:[%s1 + $0x1a] sm:$0x1]
      %v645 = vld [vmem:[%s1 + $0x1b] sm:$0x1]
      %v646 = vld [vmem:[%s1 + $0x1c] sm:$0x1]
      %v647 = vld [vmem:[%s1 + $0x1d] sm:$0x1]
      %v648 = vld [vmem:[%s1 + $0x1e] sm:$0x1]
      %v649 = vld [vmem:[%s1 + $0x1f] sm:$0x1]
      %v682 = vlaneseq
      %v683 = vshrl.u32 %v682, 7
      %v684 = vsub.s32 0, %v683
      %v685 = vrot.slane %v618, %v684
      %v686 = vlaneseq
      %v687 = vshrl.u32 %v686, 7
      %v688 = vsub.s32 0, %v687
      %v689 = vrot.slane %v619, %v688
      %v690 = vlaneseq
      %v691 = vshrl.u32 %v690, 7
      %v692 = vsub.s32 0, %v691
      %v693 = vrot.slane %v620, %v692
      %v694 = vlaneseq
      %v695 = vshrl.u32 %v694, 7
      %v696 = vsub.s32 0, %v695
      %v697 = vrot.slane %v621, %v696
      %v698 = vlaneseq
      %v699 = vshrl.u32 %v698, 7
      %v700 = vsub.s32 0, %v699
      %v701 = vrot.slane %v622, %v700
      %v702 = vlaneseq
      %v703 = vshrl.u32 %v702, 7
      %v704 = vsub.s32 0, %v703
      %v705 = vrot.slane %v623, %v704
      %v706 = vlaneseq
      %v707 = vshrl.u32 %v706, 7
      %v708 = vsub.s32 0, %v707
      %v709 = vrot.slane %v624, %v708
      %v710 = vlaneseq
      %v711 = vshrl.u32 %v710, 7
      %v712 = vsub.s32 0, %v711
      %v713 = vrot.slane %v625, %v712
      %v714 = vlaneseq
      %v715 = vshrl.u32 %v714, 7
      %v716 = vsub.s32 0, %v715
      %v717 = vrot.slane %v626, %v716
      %v718 = vlaneseq
      %v719 = vshrl.u32 %v718, 7
      %v720 = vsub.s32 0, %v719
      %v721 = vrot.slane %v627, %v720
      %v722 = vlaneseq
      %v723 = vshrl.u32 %v722, 7
      %v724 = vsub.s32 0, %v723
      %v725 = vrot.slane %v628, %v724
      %v726 = vlaneseq
      %v727 = vshrl.u32 %v726, 7
      %v728 = vsub.s32 0, %v727
      %v729 = vrot.slane %v629, %v728
      %v730 = vlaneseq
      %v731 = vshrl.u32 %v730, 7
      %v732 = vsub.s32 0, %v731
      %v733 = vrot.slane %v630, %v732
      %v734 = vlaneseq
      %v735 = vshrl.u32 %v734, 7
      %v736 = vsub.s32 0, %v735
      %v737 = vrot.slane %v631, %v736
      %v738 = vlaneseq
      %v739 = vshrl.u32 %v738, 7
      %v740 = vsub.s32 0, %v739
      %v741 = vrot.slane %v632, %v740
      %v742 = vlaneseq
      %v743 = vshrl.u32 %v742, 7
      %v744 = vsub.s32 0, %v743
      %v745 = vrot.slane %v633, %v744
      %v746 = vlaneseq
      %v747 = vshrl.u32 %v746, 7
      %v748 = vsub.s32 0, %v747
      %v749 = vrot.slane %v634, %v748
      %v750 = vlaneseq
      %v751 = vshrl.u32 %v750, 7
      %v752 = vsub.s32 0, %v751
      %v753 = vrot.slane %v635, %v752
      %v754 = vlaneseq
      %v755 = vshrl.u32 %v754, 7
      %v756 = vsub.s32 0, %v755
      %v757 = vrot.slane %v636, %v756
      %v758 = vlaneseq
      %v759 = vshrl.u32 %v758, 7
      %v760 = vsub.s32 0, %v759
      %v761 = vrot.slane %v637, %v760
      %v762 = vlaneseq
      %v763 = vshrl.u32 %v762, 7
      %v764 = vsub.s32 0, %v763
      %v765 = vrot.slane %v638, %v764
      %v766 = vlaneseq
      %v767 = vshrl.u32 %v766, 7
      %v768 = vsub.s32 0, %v767
      %v769 = vrot.slane %v639, %v768
      %v770 = vlaneseq
      %v771 = vshrl.u32 %v770, 7
      %v772 = vsub.s32 0, %v771
      %v773 = vrot.slane %v640, %v772
      %v774 = vlaneseq
      %v775 = vshrl.u32 %v774, 7
      %v776 = vsub.s32 0, %v775
      %v777 = vrot.slane %v641, %v776
      %v778 = vlaneseq
      %v779 = vshrl.u32 %v778, 7
      %v780 = vsub.s32 0, %v779
      %v781 = vrot.slane %v642, %v780
      %v782 = vlaneseq
      %v783 = vshrl.u32 %v782, 7
      %v784 = vsub.s32 0, %v783
      %v785 = vrot.slane %v643, %v784
      %v786 = vlaneseq
      %v787 = vshrl.u32 %v786, 7
      %v788 = vsub.s32 0, %v787
      %v789 = vrot.slane %v644, %v788
      %v790 = vlaneseq
      %v791 = vshrl.u32 %v790, 7
      %v792 = vsub.s32 0, %v791
      %v793 = vrot.slane %v645, %v792
      %v794 = vlaneseq
      %v795 = vshrl.u32 %v794, 7
      %v796 = vsub.s32 0, %v795
      %v797 = vrot.slane %v646, %v796
      %v798 = vlaneseq
      %v799 = vshrl.u32 %v798, 7
      %v800 = vsub.s32 0, %v799
      %v801 = vrot.slane %v647, %v800
      %v802 = vlaneseq
      %v803 = vshrl.u32 %v802, 7
      %v804 = vsub.s32 0, %v803
      %v805 = vrot.slane %v648, %v804
      %v806 = vlaneseq
      %v807 = vshrl.u32 %v806, 7
      %v808 = vsub.s32 0, %v807
      %v809 = vrot.slane %v649, %v808
      %s842 = scalar_lea.vmem %s167, 512
      %843 = vst.msk [vmem:[%s842] sm:$0xff] %vm553, %v685
      %844 = vst.msk [vmem:[%s842 + $0x8] sm:$0xff] %vm553, %v685
      %845 = vst.msk [vmem:[%s842 + $0x10] sm:$0xff] %vm553, %v689
      %846 = vst.msk [vmem:[%s842 + $0x18] sm:$0xff] %vm553, %v689
      %847 = vst.msk [vmem:[%s842 + $0x20] sm:$0xff] %vm553, %v693
      %848 = vst.msk [vmem:[%s842 + $0x28] sm:$0xff] %vm553, %v693
      %849 = vst.msk [vmem:[%s842 + $0x30] sm:$0xff] %vm553, %v697
      %850 = vst.msk [vmem:[%s842 + $0x38] sm:$0xff] %vm553, %v697
      %851 = vst.msk [vmem:[%s842 + $0x40] sm:$0xff] %vm553, %v701
      %852 = vst.msk [vmem:[%s842 + $0x48] sm:$0xff] %vm553, %v701
      %853 = vst.msk [vmem:[%s842 + $0x50] sm:$0xff] %vm553, %v705
      %854 = vst.msk [vmem:[%s842 + $0x58] sm:$0xff] %vm553, %v705
      %855 = vst.msk [vmem:[%s842 + $0x60] sm:$0xff] %vm553, %v709
      %856 = vst.msk [vmem:[%s842 + $0x68] sm:$0xff] %vm553, %v709
      %857 = vst.msk [vmem:[%s842 + $0x70] sm:$0xff] %vm553, %v713
      %858 = vst.msk [vmem:[%s842 + $0x78] sm:$0xff] %vm553, %v713
      %859 = vst.msk [vmem:[%s842 + $0x80] sm:$0xff] %vm553, %v717
      %860 = vst.msk [vmem:[%s842 + $0x88] sm:$0xff] %vm553, %v717
      %861 = vst.msk [vmem:[%s842 + $0x90] sm:$0xff] %vm553, %v721
      %862 = vst.msk [vmem:[%s842 + $0x98] sm:$0xff] %vm553, %v721
      %863 = vst.msk [vmem:[%s842 + $0xa0] sm:$0xff] %vm553, %v725
      %864 = vst.msk [vmem:[%s842 + $0xa8] sm:$0xff] %vm553, %v725
      %865 = vst.msk [vmem:[%s842 + $0xb0] sm:$0xff] %vm553, %v729
      %866 = vst.msk [vmem:[%s842 + $0xb8] sm:$0xff] %vm553, %v729
      %867 = vst.msk [vmem:[%s842 + $0xc0] sm:$0xff] %vm553, %v733
      %868 = vst.msk [vmem:[%s842 + $0xc8] sm:$0xff] %vm553, %v733
      %869 = vst.msk [vmem:[%s842 + $0xd0] sm:$0xff] %vm553, %v737
      %870 = vst.msk [vmem:[%s842 + $0xd8] sm:$0xff] %vm553, %v737
      %871 = vst.msk [vmem:[%s842 + $0xe0] sm:$0xff] %vm553, %v741
      %872 = vst.msk [vmem:[%s842 + $0xe8] sm:$0xff] %vm553, %v741
      %873 = vst.msk [vmem:[%s842 + $0xf0] sm:$0xff] %vm553, %v745
      %874 = vst.msk [vmem:[%s842 + $0xf8] sm:$0xff] %vm553, %v745
      %875 = vst.msk [vmem:[%s842 + $0x100] sm:$0xff] %vm553, %v749
      %876 = vst.msk [vmem:[%s842 + $0x108] sm:$0xff] %vm553, %v749
      %877 = vst.msk [vmem:[%s842 + $0x110] sm:$0xff] %vm553, %v753
      %878 = vst.msk [vmem:[%s842 + $0x118] sm:$0xff] %vm553, %v753
      %879 = vst.msk [vmem:[%s842 + $0x120] sm:$0xff] %vm553, %v757
      %880 = vst.msk [vmem:[%s842 + $0x128] sm:$0xff] %vm553, %v757
      %881 = vst.msk [vmem:[%s842 + $0x130] sm:$0xff] %vm553, %v761
      %882 = vst.msk [vmem:[%s842 + $0x138] sm:$0xff] %vm553, %v761
      %883 = vst.msk [vmem:[%s842 + $0x140] sm:$0xff] %vm553, %v765
      %884 = vst.msk [vmem:[%s842 + $0x148] sm:$0xff] %vm553, %v765
      %885 = vst.msk [vmem:[%s842 + $0x150] sm:$0xff] %vm553, %v769
      %886 = vst.msk [vmem:[%s842 + $0x158] sm:$0xff] %vm553, %v769
      %887 = vst.msk [vmem:[%s842 + $0x160] sm:$0xff] %vm553, %v773
      %888 = vst.msk [vmem:[%s842 + $0x168] sm:$0xff] %vm553, %v773
      %889 = vst.msk [vmem:[%s842 + $0x170] sm:$0xff] %vm553, %v777
      %890 = vst.msk [vmem:[%s842 + $0x178] sm:$0xff] %vm553, %v777
      %891 = vst.msk [vmem:[%s842 + $0x180] sm:$0xff] %vm553, %v781
      %892 = vst.msk [vmem:[%s842 + $0x188] sm:$0xff] %vm553, %v781
      %893 = vst.msk [vmem:[%s842 + $0x190] sm:$0xff] %vm553, %v785
      %894 = vst.msk [vmem:[%s842 + $0x198] sm:$0xff] %vm553, %v785
      %895 = vst.msk [vmem:[%s842 + $0x1a0] sm:$0xff] %vm553, %v789
      %896 = vst.msk [vmem:[%s842 + $0x1a8] sm:$0xff] %vm553, %v789
      %897 = vst.msk [vmem:[%s842 + $0x1b0] sm:$0xff] %vm553, %v793
      %898 = vst.msk [vmem:[%s842 + $0x1b8] sm:$0xff] %vm553, %v793
      %899 = vst.msk [vmem:[%s842 + $0x1c0] sm:$0xff] %vm553, %v797
      %900 = vst.msk [vmem:[%s842 + $0x1c8] sm:$0xff] %vm553, %v797
      %901 = vst.msk [vmem:[%s842 + $0x1d0] sm:$0xff] %vm553, %v801
      %902 = vst.msk [vmem:[%s842 + $0x1d8] sm:$0xff] %vm553, %v801
      %903 = vst.msk [vmem:[%s842 + $0x1e0] sm:$0xff] %vm553, %v805
      %904 = vst.msk [vmem:[%s842 + $0x1e8] sm:$0xff] %vm553, %v805
      %905 = vst.msk [vmem:[%s842 + $0x1f0] sm:$0xff] %vm553, %v809
      %906 = vst.msk [vmem:[%s842 + $0x1f8] sm:$0xff] %vm553, %v809
      %s907 = smul.u32 2, %s18
      %p908 = scmp.lt.s32.totalorder %s17, 1
      %s909 = scalar_select %p908, %s17, 1
      %p910 = scmp.lt.s32.totalorder %s907, 1
      %s911 = scalar_select %p910, %s907, 1
      %s912 = smul.addr %s909, 128
      %s913 = sadd.s32 %s911, %s912
      %s914 = smul.addr %s913, 8
      %s915 = scalar_lea.vmem %s2, %s914
      // Predicated region
      $region29: #{tpu_custom_call.1} parent=27 // pred_check
        %p916 = pneg %p92
      $region30: #{tpu_custom_call.1} parent=27 // pred_check_branch
        %918 = sbr.rel (%p916) target = $region32
      $region31: #{tpu_custom_call.1} parent=27 // pred_region
        %s919 = smul.u32 2, %s18
      $region32: #{tpu_custom_call.1} parent=27 // pred_fallthru
        _
    $region28: #{tpu_custom_call.1} parent=5 // pred_fallthru
      _
    %p920 = scmp.le.s32.totalorder 2, %s8
    // Predicated region
    $region33: #{tpu_custom_call.1} parent=5 // pred_check
      %p921 = pneg %p920
    $region34: #{tpu_custom_call.1} parent=5 // pred_check_branch
      %923 = sbr.rel (%p921) target = $region36
    $region35: #{tpu_custom_call.1} parent=5 // pred_region
      %s924 = ssub.s32 %s8, 2
      // Predicated region
      $region37: #{tpu_custom_call.1} parent=35 // pred_check
        %p925 = pneg %p98
      $region38: #{tpu_custom_call.1} parent=35 // pred_check_branch
        %927 = sbr.rel (%p925) target = $region40
      $region39: #{tpu_custom_call.1} parent=35 // pred_region
        %s928 = smul.u32 2, %s20
        %p929 = scmp.lt.s32.totalorder %s19, 1
        %s930 = scalar_select %p929, %s19, 1
        %p931 = scmp.lt.s32.totalorder %s928, 1
        %s932 = scalar_select %p931, %s928, 1
        %s933 = smul.addr %s930, 128
        %s934 = sadd.s32 %s932, %s933
        %s935 = smul.addr %s934, 8
        %s936 = scalar_lea.vmem %s2, %s935
      $region40: #{tpu_custom_call.1} parent=35 // pred_fallthru
        _
    $region36: #{tpu_custom_call.1} parent=5 // pred_fallthru
      _
  $region6: #{tpu_custom_call.1} parent=0 // loop_footer
    %s12 = sadd.s32 1, %s8
  $region7: #{tpu_custom_call.1} parent=0 // loop_footer_branch
    %7 = sbr.rel target = $region3
  $region8: #{tpu_custom_call.1} parent=0 // loop_exit
    _

</llo_original>
